<compile_context>
chip_gen: v5e
topology: v5e:2x2
jax: 0.10.0
libtpu: 0.0.40
codegen_flags: <defaults>
</compile_context>

<pallas_src>
import math

import numpy as np

import jax
import jax.numpy as jnp
from jax.experimental import pallas as pl
from jax.experimental.pallas import tpu as pltpu


def _round_up(x: int, m: int) -> int:
    return ((x + m - 1) // m) * m


def _time_embedding_kernel(freq_ref, phase_ref, x_ref, out_ref):
    # freq_ref:  (1, time_dim) f32 -- inv_freq duplicated across both halves
    # phase_ref: (1, time_dim) f32 -- [0..0, pi/2..pi/2]
    # x_ref:     (TILE_N, 1)   f32 -- timesteps (one per row)
    # out_ref:   (TILE_N, time_dim) -- [sin(x*f) | cos(x*f)]
    theta = x_ref[...] * freq_ref[...] + phase_ref[...]
    out_ref[...] = jnp.sin(theta).astype(out_ref.dtype)


def _choose_tiling(n: int, time_dim: int, tile_hint: int, vmem_budget_bytes: int):
    """Pick (tile, n_pad). tile is a multiple of 8; prefers tile | n_pad."""
    n8 = _round_up(max(n, 1), 8)
    # Per-row, double-buffered VMEM bytes: output block + lane-padded (tile,1) input.
    per_row = 2 * time_dim * 4 + 2 * 128 * 4
    budget_tile = max(8, (vmem_budget_bytes // per_row) // 8 * 8)
    cap = max(8, min(tile_hint, budget_tile))
    # Keep >= 2 grid steps whenever possible so v7x can use both TensorCores.
    if n8 >= 16:
        cap = min(cap, _round_up(n8 // 2 + (n8 % 2), 8))
    cap = min(cap, n8)
    # Largest multiple-of-8 tile <= cap that divides n8: no padded-tile writes
    # and no post-kernel slice copy (beyond the unavoidable <8-row remainder).
    tile_div = next((t for t in range(cap, 7, -8) if n8 % t == 0), 8)
    if tile_div * 4 >= cap:
        return tile_div, n8
    # Pathological n (e.g. 8 * large_prime): fall back to padding up to a
    # multiple of the capped tile (costs one padded tail tile + a slice copy).
    return cap, _round_up(n8, cap)


def time_embedding(x: jnp.ndarray,
                   time_dim: int,
                   *,
                   tile_n: int = 8192,
                   out_dtype=jnp.float32,
                   vmem_budget_bytes: int = 24 << 20) -> jnp.ndarray:
    """Pallas implementation of TimeEmbedding.forward.

    x: timesteps of any shape. Returns array of shape (*x.shape, time_dim).
    """
    assert time_dim % 2 == 0, "time_dim must be even"
    shape = x.shape
    xf = jnp.asarray(x, jnp.float32).reshape(-1, 1)                  # (N, 1)
    n = xf.shape[0]
    if n == 0:
        return jnp.zeros((*shape, time_dim), out_dtype)

    half = time_dim // 2
    # Constant row vectors, built host-side (trace-time numpy constants).
    ar = np.arange(0, time_dim, 2, dtype=np.float32)
    inv_freq = np.exp(ar * np.float32(-math.log(10000.0) / time_dim))
    freq_full = np.concatenate([inv_freq, inv_freq]).reshape(1, time_dim)
    phase = np.concatenate([np.zeros((half,), np.float32),
                            np.full((half,), math.pi / 2.0, np.float32)]
                           ).reshape(1, time_dim)

    tile, n_pad = _choose_tiling(n, time_dim, tile_n, vmem_budget_bytes)
    if n_pad != n:
        xf = jnp.pad(xf, ((0, n_pad - n), (0, 0)))

    grid = (n_pad // tile,)
    out_itemsize = jnp.dtype(out_dtype).itemsize
    cost = pl.CostEstimate(
        flops=2 * n_pad * time_dim,                       # mul + add per output elem
        transcendentals=n_pad * time_dim,                 # one sin per output elem
        bytes_accessed=(n_pad * 4                         # read timesteps
                        + 2 * time_dim * 4                # freq + phase (once)
                        + n_pad * time_dim * out_itemsize),   # write embedding
    )
    # Actual VMEM: double-buffered output + lane-padded input + tiny constants.
    vmem_bytes = (2 * tile * (time_dim + 128) * 4
                  + 4 * 8 * _round_up(time_dim, 128) * 4)
    vmem_limit = int(min(64 << 20, max(16 << 20, vmem_bytes + (2 << 20))))

    out = pl.pallas_call(
        _time_embedding_kernel,
        out_shape=jax.ShapeDtypeStruct((n_pad, time_dim), out_dtype),
        grid=grid,
        in_specs=[
            pl.BlockSpec((1, time_dim), lambda i: (0, 0)),   # freq_full (fetched once)
            pl.BlockSpec((1, time_dim), lambda i: (0, 0)),   # phase     (fetched once)
            pl.BlockSpec((tile, 1), lambda i: (i, 0)),       # timesteps tile
        ],
        out_specs=pl.BlockSpec((tile, time_dim), lambda i: (i, 0)),
        compiler_params=pltpu.CompilerParams(
            dimension_semantics=("parallel",),               # shard tiles across TCs (v7x)
            vmem_limit_bytes=vmem_limit,
        ),
        cost_estimate=cost,
    )(freq_full, phase, xf)

    if n_pad != n:
        out = out[:n]
    return out.reshape(*shape, time_dim)


def _reference(x: jnp.ndarray, time_dim: int) -> jnp.ndarray:
    shape = x.shape
    ar = jnp.arange(0, time_dim, 2, dtype=jnp.float32)
    inv_freq = jnp.exp(ar * (-math.log(10000.0) / time_dim))
    sinusoid = jnp.outer(x.reshape(-1).astype(jnp.float32), inv_freq)
    pos_emb = jnp.concatenate([jnp.sin(sinusoid), jnp.cos(sinusoid)], axis=-1)
    return pos_emb.reshape(*shape, time_dim)


if __name__ == "__main__":
    time_dim = 128
    key = jax.random.PRNGKey(0)
    k1, k2, k3 = jax.random.split(key, 3)

    # Case 1: typical DDPM timestep batch (multiple of 8, single tile).
    x8 = jax.random.randint(k1, (8,), 0, 1000).astype(jnp.float32)
    emb8 = jax.block_until_ready(time_embedding(x8, time_dim))
    ref8 = _reference(x8, time_dim)
    assert emb8.shape == (8, time_dim), emb8.shape
    assert float(jnp.max(jnp.abs(emb8 - ref8))) < 2e-4, "mismatch vs reference (batch=8)"

    # Case 2: batch not a multiple of 8 -> exercises the <8-row remainder path.
    x5 = jax.random.randint(k2, (5,), 0, 1000).astype(jnp.float32)
    emb5 = jax.block_until_ready(time_embedding(x5, time_dim))
    ref5 = _reference(x5, time_dim)
    assert emb5.shape == (5, time_dim), emb5.shape
    assert float(jnp.max(jnp.abs(emb5 - ref5))) < 2e-4, "mismatch vs reference (batch=5)"

    # Case 3: multi-tile grid (tile divides round_up(n, 8); grid >= 2 tiles).
    x48 = jax.random.randint(k3, (48,), 0, 1000).astype(jnp.float32)
    emb48 = jax.block_until_ready(time_embedding(x48, time_dim))
    ref48 = _reference(x48, time_dim)
    assert emb48.shape == (48, time_dim), emb48.shape
    assert float(jnp.max(jnp.abs(emb48 - ref48))) < 2e-4, "mismatch vs reference (batch=48)"

    print("KERNEL_OK")
</pallas_src>

<mosaic_0001>
module attributes {stable_mosaic.version = 11 : i64} {
  func.func @_time_embedding_kernel(%arg0: i32, %arg1: memref<1x128xf32, #tpu.memory_space<vmem>>, %arg2: memref<1x128xf32, #tpu.memory_space<vmem>>, %arg3: memref<8x1xf32, #tpu.memory_space<vmem>>, %arg4: memref<8x128xf32, #tpu.memory_space<vmem>>) attributes {dimension_semantics = [#tpu.dimension_semantics<parallel>], iteration_bounds = array<i64: 1>, scalar_prefetch = 0 : i64, scratch_operands = 0 : i64, tpu.core_type = #tpu.core_type<tc>, window_params = [{pipeline_mode = #tpu.pipeline_mode<synchronous>, transform_indices = @transform_0, window_bounds = array<i64: 1, 128>}, {pipeline_mode = #tpu.pipeline_mode<synchronous>, transform_indices = @transform_1, window_bounds = array<i64: 1, 128>}, {transform_indices = @transform_2, window_bounds = array<i64: 8, 1>}, {transform_indices = @transform_3, window_bounds = array<i64: 8, 128>}]} {
    %c0 = arith.constant 0 : index
    %c0_0 = arith.constant 0 : index
    %0 = vector.load %arg3[%c0, %c0_0] : memref<8x1xf32, #tpu.memory_space<vmem>>, vector<8x1xf32>
    %c0_1 = arith.constant 0 : index
    %c0_2 = arith.constant 0 : index
    %1 = vector.load %arg1[%c0_1, %c0_2] : memref<1x128xf32, #tpu.memory_space<vmem>>, vector<1x128xf32>
    %2 = vector.broadcast %0 : vector<8x1xf32> to vector<8x128xf32>
    %3 = vector.broadcast %1 : vector<1x128xf32> to vector<8x128xf32>
    %4 = arith.mulf %2, %3 : vector<8x128xf32>
    %c0_3 = arith.constant 0 : index
    %c0_4 = arith.constant 0 : index
    %5 = vector.load %arg2[%c0_3, %c0_4] : memref<1x128xf32, #tpu.memory_space<vmem>>, vector<1x128xf32>
    %6 = vector.broadcast %5 : vector<1x128xf32> to vector<8x128xf32>
    %7 = arith.addf %4, %6 : vector<8x128xf32>
    %8 = math.sin %7 : vector<8x128xf32>
    %c0_5 = arith.constant 0 : index
    %c0_6 = arith.constant 0 : index
    %9 = vector.load %arg4[%c0_5, %c0_6] : memref<8x128xf32, #tpu.memory_space<vmem>>, vector<8x128xf32>
    tpu.vector_store %arg4[%c0_5, %c0_6], %8 {strides = array<i32>} : memref<8x128xf32, #tpu.memory_space<vmem>>, vector<8x128xf32>,
    return
  }
  func.func @transform_0(%arg0: i32) -> (i32, i32) {
    %c0_i32 = arith.constant 0 : i32
    %c0_i32_0 = arith.constant 0 : i32
    %c0_i32_1 = arith.constant 0 : i32
    return %c0_i32, %c0_i32_0 : i32, i32
  }
  func.func @transform_1(%arg0: i32) -> (i32, i32) {
    %c0_i32 = arith.constant 0 : i32
    %c0_i32_0 = arith.constant 0 : i32
    %c0_i32_1 = arith.constant 0 : i32
    return %c0_i32, %c0_i32_0 : i32, i32
  }
  func.func @transform_2(%arg0: i32) -> (i32, i32) {
    %c0_i32 = arith.constant 0 : i32
    %c0_i32_0 = arith.constant 0 : i32
    return %arg0, %c0_i32 : i32, i32
  }
  func.func @transform_3(%arg0: i32) -> (i32, i32) {
    %c0_i32 = arith.constant 0 : i32
    %c0_i32_0 = arith.constant 0 : i32
    return %arg0, %c0_i32 : i32, i32
  }
}

</mosaic_0001>

<llo_original>
// kernel: tpu_custom_call.1
$region0: #{tpu_custom_call.1}
  #allocation0 [shape = 'u32[]', space=smem, size = 0x4, offset = 0x4, fixed_abs, tag = 'smem constant byte address 0x4 - core index']
  #allocation1 [shape = 'u32[72,128]{1,0:T(1,128)}', space=vmem, size = 0x9000, scoped, tag = 'internal scratch']
  %s0 = inlined_call_operand.vmem [shape: f32[1,128], index: 0, kind: input, shape index: {}]
  %s1 = inlined_call_operand.vmem [shape: f32[1,128], index: 1, kind: input, shape index: {}]
  %s2 = inlined_call_operand.vmem [shape: f32[8,1], index: 2, kind: input, shape index: {}]
  %s3 = inlined_call_operand.hbm [shape: f32[8,128], index: 3, kind: output, shape index: {}]
  %s4 = sld [smem:[#allocation0]]
  $region22: #{tpu_custom_call.1} parent=0
    _
  %s6 = ssub.s32 1, %s4
  %s7 = scalar_select 0, %s6, %s4
  $region1: #{tpu_custom_call.1} parent=0
    #allocation2 [shape = 'u8[4096]{0}', space=vmem, size = 0x1000, scoped, tag = 'output window, operand 0, single buffered']
    #allocation3 [shape = 's32[1]{0}', space=sflag, size = 0x4, scoped, tag = 'scoped memory for tpu_custom_call.1']
    %8 = vsyncpa [#allocation3], 0
    // Predicated region
    $region2: #{tpu_custom_call.1} parent=1 // pred_check
      _
    $region3: #{tpu_custom_call.1} parent=1 // pred_check_branch
      %10 = sbr.rel (0) target = $region5
    $region4: #{tpu_custom_call.1} parent=1 // pred_region
      _
    $region5: #{tpu_custom_call.1} parent=1 // pred_fallthru
      _
    // Predicated region
    $region6: #{tpu_custom_call.1} parent=1 // pred_check
      _
    $region7: #{tpu_custom_call.1} parent=1 // pred_check_branch
      %12 = sbr.rel (0) target = $region9
    $region8: #{tpu_custom_call.1} parent=1 // pred_region
      _
    $region9: #{tpu_custom_call.1} parent=1 // pred_fallthru
      _
    // Predicated region
    $region10: #{tpu_custom_call.1} parent=1 // pred_check
      _
    $region11: #{tpu_custom_call.1} parent=1 // pred_check_branch
      %14 = sbr.rel (0) target = $region13
    $region12: #{tpu_custom_call.1} parent=1 // pred_region
      _
    $region13: #{tpu_custom_call.1} parent=1 // pred_fallthru
      _
    %v15 = vld [vmem:[%s2] sm:$0xff]
    %v16 = vld [vmem:[%s0] sm:$0x1]
    %18 = vset.pattern.permute.xlu0 0
    %19 = vperm.xlu0 %18, %v15
    %v20 = vpop.permute.xlu0 %19
    %v23 = vperm.slane %v16, 0
    %v25 = vmul.f32 %v20, %v23
    %v26 = vld [vmem:[%s1] sm:$0x1]
    %v28 = vperm.slane %v26, 0
    %v30 = vadd.f32 %v25, %v28
    %v31 = vand.u32 2147483647, %v30
    %vm32 = vcmp.le.f32.partialorder %v31, 0.7853982
    %vm33 = vcmp.lt.s32.totalorder %v30, 0
    %v34 = vand.u32 %v30, 2139095040
    %v35 = vshrl.u32 %v34, 23
    %v36 = vsub.s32 %v35, 127
    %v37 = vand.u32 2147483647, %v30
    %v38 = vand.u32 %v37, 8388607
    %v39 = vor.u32 %v38, 8388608
    %v40 = vsub.s32 0, %v39
    %v41 = vadd.s32 %v36, 1
    %vm42 = vcmp.gt.s32.totalorder %v41, 0
    %v43 = vsel %vm42, %v41, 0
    %v44 = vshrl.u32 %v43, 5
    %v45 = vand.u32 %v43, 31
    %v46 = vsub.s32 32, %v45
    %v47 = vshrl.u32 683565275, %v46
    %v48 = vshll.u32 683565275, %v45
    %v49 = vshrl.u32 2475754826, %v46
    %v50 = vor.u32 %v48, %v49
    %v51 = vshll.u32 2475754826, %v45
    %v52 = vshrl.u32 2131351028, %v46
    %v53 = vor.u32 %v51, %v52
    %v54 = vshll.u32 2131351028, %v45
    %v55 = vshrl.u32 2102212464, %v46
    %v56 = vor.u32 %v54, %v55
    %v57 = vshll.u32 2102212464, %v45
    %v58 = vshrl.u32 920167782, %v46
    %v59 = vor.u32 %v57, %v58
    %v60 = vshll.u32 920167782, %v45
    %v61 = vshrl.u32 1326507024, %v46
    %v62 = vor.u32 %v60, %v61
    %vm63 = vcmp.lt.s32.totalorder %v44, 1
    %vm64 = vcmp.lt.s32.totalorder %v44, 2
    %vm65 = vcmp.lt.s32.totalorder %v44, 3
    %vm66 = vcmp.lt.s32.totalorder %v44, 4
    %v67 = vsel %vm63, %v47, %v50
    %v68 = vsel %vm66, %v56, 2102212464
    %v69 = vsel %vm65, %v53, %v68
    %v70 = vsel %vm64, %v67, %v69
    %v71 = vsel %vm63, %v50, %v53
    %v72 = vsel %vm66, %v59, 920167782
    %v73 = vsel %vm65, %v56, %v72
    %v74 = vsel %vm64, %v71, %v73
    %v75 = vsel %vm63, %v53, %v56
    %v76 = vsel %vm66, %v62, 1326507024
    %v77 = vsel %vm65, %v59, %v76
    %v78 = vsel %vm64, %v75, %v77
    %v79 = vshll.u32 %v39, 8
    %v80 = vand.u32 %v79, 65535
    %v81 = vshrl.u32 %v79, 16
    %v82 = vand.u32 %v78, 65535
    %v83 = vshrl.u32 %v78, 16
    %v84 = vmul.u32 %v80, %v82
    %v85 = vmul.u32 %v80, %v83
    %v86 = vmul.u32 %v81, %v82
    %v87 = vmul.u32 %v81, %v83
    %v88 = vshll.u32 %v85, 16
    %v89 = vshrl.u32 %v85, 16
    %v90 = vshll.u32 %v86, 16
    %v91 = vshrl.u32 %v86, 16
    %vm92 = vc.u32 %v84, %v88
    %v93 = vsel %vm92, 1, 0
    %v94 = vadd.s32 %v84, %v88
    %v95 = vadd.s32 %v87, %v93
    %vm96 = vc.u32 %v94, %v90
    %v97 = vsel %vm96, 1, 0
    %v98 = vadd.s32 %v94, %v90
    %v99 = vadd.s32 %v95, %v97
    %v100 = vadd.s32 %v99, %v89
    %v101 = vadd.s32 %v100, %v91
    %v102 = vand.u32 %v79, 65535
    %v103 = vshrl.u32 %v79, 16
    %v104 = vand.u32 %v74, 65535
    %v105 = vshrl.u32 %v74, 16
    %v106 = vmul.u32 %v102, %v104
    %v107 = vmul.u32 %v102, %v105
    %v108 = vmul.u32 %v103, %v104
    %v109 = vmul.u32 %v103, %v105
    %v110 = vshll.u32 %v107, 16
    %v111 = vshrl.u32 %v107, 16
    %v112 = vshll.u32 %v108, 16
    %v113 = vshrl.u32 %v108, 16
    %vm114 = vc.u32 %v106, %v110
    %v115 = vsel %vm114, 1, 0
    %v116 = vadd.s32 %v106, %v110
    %v117 = vadd.s32 %v109, %v115
    %vm118 = vc.u32 %v116, %v112
    %v119 = vsel %vm118, 1, 0
    %v120 = vadd.s32 %v116, %v112
    %v121 = vadd.s32 %v117, %v119
    %v122 = vadd.s32 %v121, %v111
    %v123 = vadd.s32 %v122, %v113
    %v124 = vmul.u32 %v79, %v70
    %v125 = vadd.s32 %v101, %v120
    %vm126 = vc.u32 %v101, %v120
    %v127 = vadd.s32 %v123, 1
    %v128 = vsel %vm126, %v127, %v123
    %v129 = vadd.s32 %v124, %v128
    %v130 = vadd.s32 %v129, 536870912
    %v131 = vshrl.u32 %v130, 30
    %v132 = vshll.u32 %v131, 30
    %v133 = vsub.s32 %v129, %v132
    %vm134 = vcmp.lt.s32.totalorder %v133, 0
    %v135 = vsub.s32 0, %v133
    %v136 = vsel %vm134, %v135, %v133
    %v137 = vclz %v136
    %v138 = vsub.s32 %v137, 2
    %vm139 = vcmp.gt.s32.totalorder 0, %v138
    %v140 = vsel %vm139, 0, %v138
    %v141 = vsub.s32 32, %v140
    %v142 = vshll.u32 %v133, %v140
    %v143 = vshrl.u32 %v125, %v141
    %v144 = vor.u32 %v142, %v143
    %v145 = vsub.s32 4294967266, %v140
    %v146 = vadd.s32 %v145, 127
    %v147 = vshll.u32 %v146, 23
    %v148 = vor.u32 4788187, %v147
    %v149 = vand.u32 2147483647, %v148
    %v151 = vcvt.s32.f32 %v144
    %v152 = vmul.f32 %v151, %v149
    %v153 = vxor.u32 %v152, 2147483648
    %v154 = vsel %vm33, %v153, %v152
    %v155 = vsub.s32 4, %v131
    %v156 = vsel %vm33, %v155, %v131
    %v157 = vsel %vm32, %v30, %v154
    %v158 = vsel %vm32, 0, %v156
    %v159 = vmul.f32 %v157, %v157
    %v160 = vmul.f32 %v159, -0.001358992
    %v161 = vadd.f32 %v160, 0.041655596
    %v162 = vmul.f32 %v159, %v161
    %v163 = vadd.f32 %v162, -0.4999988
    %v164 = vmul.f32 %v159, %v163
    %v165 = vadd.f32 1.0, %v164
    %v166 = vmul.f32 %v157, %v157
    %v167 = vmul.f32 %v166, -0.00019511016
    %v168 = vadd.f32 %v167, 0.008332121
    %v169 = vmul.f32 %v166, %v168
    %v170 = vadd.f32 %v169, -0.16666654
    %v171 = vmul.f32 %v166, %v170
    %v172 = vadd.f32 %v171, 1.0
    %v173 = vmul.f32 %v172, %v157
    %vm174 = vweird.f32 %v30
    %v175 = vadd.s32 %v158, 3
    %v176 = vand.u32 %v175, 3
    %vm177 = vcmp.lt.s32.totalorder %v176, 2
    %vm178 = vcmp.eq.s32.totalorder %v176, 0
    %v179 = vxor.u32 %v173, 2147483648
    %v180 = vsel %vm178, %v165, %v179
    %vm181 = vcmp.eq.s32.totalorder %v176, 2
    %v182 = vxor.u32 %v165, 2147483648
    %v183 = vsel %vm181, %v182, %v173
    %v184 = vsel %vm177, %v180, %v183
    %v185 = vsel %vm174, nan, %v184
    %186 = vst [vmem:[#allocation2] sm:$0xff] %v185
    // Predicated region
    $region14: #{tpu_custom_call.1} parent=1 // pred_check
      _
    $region15: #{tpu_custom_call.1} parent=1 // pred_check_branch
      %188 = sbr.rel (0) target = $region17
    $region16: #{tpu_custom_call.1} parent=1 // pred_region
      %190 = vsyncadd [#allocation3], 0
      %s192 = sshll.u32 [#allocation2], 4
      %s193 = int_to_ptr.vmem [resolvable:$true] %s192
      %s194 = sshll.u32 %s3, 4
      %s195 = int_to_ptr.hbm [resolvable:$true] %s194
      %197 = dma.vmem_to_hbm [thread:$0]  %s193, 128, %s195, [#allocation3]
    $region17: #{tpu_custom_call.1} parent=1 // pred_fallthru
      _
    // Predicated region
    $region18: #{tpu_custom_call.1} parent=1 // pred_check
      _
    $region19: #{tpu_custom_call.1} parent=1 // pred_check_branch
      %199 = sbr.rel (0) target = $region21
    $region20: #{tpu_custom_call.1} parent=1 // pred_region
      %201 = dma.done [#allocation3], 128
    $region21: #{tpu_custom_call.1} parent=1 // pred_fallthru
      _
    %202 = vsyncpa [#allocation3], 1

</llo_original>
